<compile_context>
chip_gen: v7x
topology: tpu7x:2x2x1
jax: 0.10.0
libtpu: 0.0.40
codegen_flags: <defaults>
</compile_context>

<pallas_src>
import functools

import jax
import jax.numpy as jnp
from jax import lax
from jax.experimental import pallas as pl
from jax.experimental.pallas import tpu as pltpu

EPS = 1e-07

_LANES = 128
_MAX_BLOCK_ROWS = 2048   # (2048, 128) f32 block = 1 MiB; 2 inputs x 2 buffers = 4 MiB VMEM


def _bce_elementwise(o, y, pos_weight):
    """Elementwise BCE in f32 (inputs cast inside the kernel)."""
    o = o.astype(jnp.float32)
    y = y.astype(jnp.float32)
    pos_loss = -y * jnp.log(o + EPS)
    neg_loss = -(1.0 - y) * jnp.log(1.0 - o + EPS)
    if pos_weight == 1.0:
        return pos_loss + neg_loss
    return jnp.float32(pos_weight) * pos_loss + neg_loss


def _valid_mask(shape, block_rows, total_count):
    """True for elements whose flat index is < total_count (ragged tail mask)."""
    i = pl.program_id(0)
    row = lax.broadcasted_iota(jnp.int32, shape, 0)
    lane = lax.broadcasted_iota(jnp.int32, shape, 1)
    elem = (i * block_rows + row) * shape[1] + lane
    return elem < total_count


def _bce_partial_kernel(o_ref, y_ref, part_ref, *,
                        pos_weight, total_count, needs_mask):
    """Per-block (8,128) partial sum of the BCE loss (for 'mean' / 'sum')."""
    block_rows, lanes = o_ref.shape
    o = o_ref[...]
    y = y_ref[...]
    if needs_mask:
        valid = _valid_mask((block_rows, lanes), block_rows, total_count)
        # Replace out-of-range lanes with safe values so log() stays finite,
        # then zero their loss contribution exactly.
        o = jnp.where(valid, o.astype(jnp.float32), 0.5)
        y = jnp.where(valid, y.astype(jnp.float32), 0.0)
        loss = _bce_elementwise(o, y, pos_weight)
        loss = jnp.where(valid, loss, 0.0)
    else:
        loss = _bce_elementwise(o, y, pos_weight)
    # Fold the block down to one (8,128) vreg with plain VPU adds; the final
    # cross-lane/sublane reduce over all blocks is done once in the wrapper.
    part_ref[0] = jnp.sum(loss.reshape(block_rows // 8, 8, lanes), axis=0)


def _bce_none_kernel(o_ref, y_ref, loss_ref, *, pos_weight):
    """Elementwise BCE, no reduction ('none')."""
    loss = _bce_elementwise(o_ref[...], y_ref[...], pos_weight)
    loss_ref[...] = loss.astype(loss_ref.dtype)


def bce_loss(output, labels, pos_weight=1.0, reduction="mean"):
    assert reduction in ("mean", "sum", "none")
    orig_shape = output.shape
    total = output.size
    pos_weight = float(pos_weight)

    out_dtype = jnp.result_type(output.dtype, labels.dtype)
    if not jnp.issubdtype(out_dtype, jnp.floating):
        out_dtype = jnp.float32

    o_flat = output.reshape(-1)
    y_flat = labels.reshape(-1)
    padded_total = ((total + _LANES - 1) // _LANES) * _LANES
    if padded_total != total:
        # Only a tiny (<128 elem) lane-tail pad; its contribution is masked
        # out exactly inside the reduce kernel / sliced off in the 'none' path.
        pad = padded_total - total
        o_flat = jnp.pad(o_flat, (0, pad))
        y_flat = jnp.pad(y_flat, (0, pad))
    rows = padded_total // _LANES
    o2 = o_flat.reshape(rows, _LANES)
    y2 = y_flat.reshape(rows, _LANES)

    block_rows = min(_MAX_BLOCK_ROWS, ((rows + 7) // 8) * 8)
    grid_rows = pl.cdiv(rows, block_rows)
    grid = (grid_rows,)
    covered = grid_rows * block_rows * _LANES
    needs_mask = covered != total

    in_specs = [pl.BlockSpec((block_rows, _LANES), lambda i: (i, 0)),
                pl.BlockSpec((block_rows, _LANES), lambda i: (i, 0))]

    if reduction == "none":
        kernel = functools.partial(_bce_none_kernel, pos_weight=pos_weight)
        loss2 = pl.pallas_call(
            kernel,
            out_shape=jax.ShapeDtypeStruct((rows, _LANES), out_dtype),
            grid_spec=pltpu.PrefetchScalarGridSpec(
                num_scalar_prefetch=0,
                grid=grid,
                in_specs=in_specs,
                out_specs=pl.BlockSpec((block_rows, _LANES), lambda i: (i, 0)),
            ),
            compiler_params=pltpu.CompilerParams(
                dimension_semantics=("parallel",)),
        )(o2, y2)
        return loss2.reshape(-1)[:total].reshape(orig_shape)

    kernel = functools.partial(_bce_partial_kernel,
                               pos_weight=pos_weight,
                               total_count=total,
                               needs_mask=needs_mask)
    partials = pl.pallas_call(
        kernel,
        out_shape=jax.ShapeDtypeStruct((grid_rows, 8, _LANES), jnp.float32),
        grid_spec=pltpu.PrefetchScalarGridSpec(
            num_scalar_prefetch=0,
            grid=grid,
            in_specs=in_specs,
            out_specs=pl.BlockSpec((1, 8, _LANES), lambda i: (i, 0, 0)),
        ),
        compiler_params=pltpu.CompilerParams(
            dimension_semantics=("parallel",)),
    )(o2, y2)

    result = jnp.sum(partials)
    if reduction == "mean":
        result = result / jnp.float32(total)
    return result


def _reference(output, labels, pos_weight=1.0, reduction="mean"):
    output = output.astype(jnp.float32)
    labels = labels.astype(jnp.float32)
    pos_loss = -labels * jnp.log(output + EPS)
    neg_loss = -(1.0 - labels) * jnp.log(1.0 - output + EPS)
    loss = pos_weight * pos_loss + neg_loss
    if reduction == "mean":
        return jnp.mean(loss)
    if reduction == "sum":
        return jnp.sum(loss)
    return loss


if __name__ == "__main__":
    key = jax.random.PRNGKey(0)
    k1, k2 = jax.random.split(key)

    # NCHW-shaped inputs: batch=2, channels=4, spatial=16x16 (elementwise op).
    shape = (2, 4, 16, 16)
    output = jax.nn.sigmoid(jax.random.normal(k1, shape, dtype=jnp.float32))
    labels = (jax.random.uniform(k2, shape) > 0.5).astype(jnp.float32)

    pos_weight = 2.0

    got_mean = jax.block_until_ready(bce_loss(output, labels, pos_weight, "mean"))
    got_sum = jax.block_until_ready(bce_loss(output, labels, pos_weight, "sum"))
    got_none = jax.block_until_ready(bce_loss(output, labels, pos_weight, "none"))

    want_mean = _reference(output, labels, pos_weight, "mean")
    want_sum = _reference(output, labels, pos_weight, "sum")
    want_none = _reference(output, labels, pos_weight, "none")

    assert jnp.allclose(got_mean, want_mean, rtol=1e-5, atol=1e-5), (got_mean, want_mean)
    assert jnp.allclose(got_sum, want_sum, rtol=1e-5, atol=1e-4), (got_sum, want_sum)
    assert jnp.allclose(got_none, want_none, rtol=1e-5, atol=1e-5)

    # pos_weight=1.0 fast path + default reduction.
    got_pw1 = jax.block_until_ready(bce_loss(output, labels, 1.0, "mean"))
    want_pw1 = _reference(output, labels, 1.0, "mean")
    assert jnp.allclose(got_pw1, want_pw1, rtol=1e-5, atol=1e-5), (got_pw1, want_pw1)

    print("KERNEL_OK")
</pallas_src>

<mosaic_0001>
module attributes {stable_mosaic.version = 11 : i64} {
  func.func @_bce_partial_kernel(%arg0: i32, %arg1: memref<16x128xf32, #tpu.memory_space<vmem>>, %arg2: memref<16x128xf32, #tpu.memory_space<vmem>>, %arg3: memref<1x8x128xf32, #tpu.memory_space<vmem>>) attributes {dimension_semantics = [#tpu.dimension_semantics<parallel>], iteration_bounds = array<i64: 1>, scalar_prefetch = 0 : i64, scratch_operands = 0 : i64, tpu.core_type = #tpu.core_type<tc>, window_params = [{transform_indices = @transform_0, window_bounds = array<i64: 16, 128>}, {transform_indices = @transform_1, window_bounds = array<i64: 16, 128>}, {transform_indices = @transform_2, window_bounds = array<i64: 1, 8, 128>}]} {
    %c0 = arith.constant 0 : index
    %c0_0 = arith.constant 0 : index
    %0 = vector.load %arg1[%c0, %c0_0] : memref<16x128xf32, #tpu.memory_space<vmem>>, vector<16x128xf32>
    %c0_1 = arith.constant 0 : index
    %c0_2 = arith.constant 0 : index
    %1 = vector.load %arg2[%c0_1, %c0_2] : memref<16x128xf32, #tpu.memory_space<vmem>>, vector<16x128xf32>
    %cst = arith.constant 0.000000e+00 : f32
    %2 = vector.broadcast %cst : f32 to vector<16x128xf32>
    %3 = arith.subf %2, %1 : vector<16x128xf32>
    %cst_3 = arith.constant 1.000000e-07 : f32
    %4 = vector.broadcast %cst_3 : f32 to vector<16x128xf32>
    %5 = arith.addf %0, %4 : vector<16x128xf32>
    %6 = math.log %5 : vector<16x128xf32>
    %7 = arith.mulf %3, %6 : vector<16x128xf32>
    %cst_4 = arith.constant 1.000000e+00 : f32
    %8 = vector.broadcast %cst_4 : f32 to vector<16x128xf32>
    %9 = arith.subf %8, %1 : vector<16x128xf32>
    %cst_5 = arith.constant 0.000000e+00 : f32
    %10 = vector.broadcast %cst_5 : f32 to vector<16x128xf32>
    %11 = arith.subf %10, %9 : vector<16x128xf32>
    %cst_6 = arith.constant 1.000000e+00 : f32
    %12 = vector.broadcast %cst_6 : f32 to vector<16x128xf32>
    %13 = arith.subf %12, %0 : vector<16x128xf32>
    %cst_7 = arith.constant 1.000000e-07 : f32
    %14 = vector.broadcast %cst_7 : f32 to vector<16x128xf32>
    %15 = arith.addf %13, %14 : vector<16x128xf32>
    %16 = math.log %15 : vector<16x128xf32>
    %17 = arith.mulf %11, %16 : vector<16x128xf32>
    %cst_8 = arith.constant 2.000000e+00 : f32
    %18 = vector.broadcast %cst_8 : f32 to vector<16x128xf32>
    %19 = arith.mulf %18, %7 : vector<16x128xf32>
    %20 = arith.addf %19, %17 : vector<16x128xf32>
    %21 = vector.shape_cast %20 : vector<16x128xf32> to vector<2x8x128xf32>
    %cst_9 = arith.constant dense<0.000000e+00> : vector<8x128xf32>
    %22 = vector.multi_reduction <add>, %21, %cst_9 [0] : vector<2x8x128xf32> to vector<8x128xf32>
    %c0_10 = arith.constant 0 : index
    %c0_11 = arith.constant 0 : index
    %c0_12 = arith.constant 0 : index
    %23 = vector.load %arg3[%c0_10, %c0_11, %c0_12] : memref<1x8x128xf32, #tpu.memory_space<vmem>>, vector<1x8x128xf32>
    %24 = vector.shape_cast %23 : vector<1x8x128xf32> to vector<8x128xf32>
    %25 = vector.shape_cast %22 : vector<8x128xf32> to vector<1x8x128xf32>
    tpu.vector_store %arg3[%c0_10, %c0_11, %c0_12], %25 {strides = array<i32>} : memref<1x8x128xf32, #tpu.memory_space<vmem>>, vector<1x8x128xf32>,
    return
  }
  func.func @transform_0(%arg0: i32) -> (i32, i32) {
    %c0_i32 = arith.constant 0 : i32
    %c0_i32_0 = arith.constant 0 : i32
    return %arg0, %c0_i32 : i32, i32
  }
  func.func @transform_1(%arg0: i32) -> (i32, i32) {
    %c0_i32 = arith.constant 0 : i32
    %c0_i32_0 = arith.constant 0 : i32
    return %arg0, %c0_i32 : i32, i32
  }
  func.func @transform_2(%arg0: i32) -> (i32, i32, i32) {
    %c0_i32 = arith.constant 0 : i32
    %c0_i32_0 = arith.constant 0 : i32
    %c0_i32_1 = arith.constant 0 : i32
    return %arg0, %c0_i32, %c0_i32_0 : i32, i32, i32
  }
}

</mosaic_0001>

<llo_original>
// kernel: tpu_custom_call.1
$region0: #{tpu_custom_call.1}
  #allocation0 [shape = 'u32[]', space=smem, size = 0x4, offset = 0x4, fixed_abs, tag = 'smem constant byte address 0x4 - core index']
  #allocation1 [shape = 'u32[144,128]{1,0:T(1,128)}', space=vmem, size = 0x12000, scoped, tag = 'internal scratch']
  %s0 = inlined_call_operand.hbm [shape: f32[16,128], index: 0, kind: input, shape index: {}]
  %s1 = inlined_call_operand.hbm [shape: f32[16,128], index: 1, kind: input, shape index: {}]
  %s2 = inlined_call_operand.hbm [shape: f32[1,8,128], index: 2, kind: output, shape index: {}]
  %s3 = sld [smem:[#allocation0]]
  $region26: #{tpu_custom_call.1} parent=0
    _
  %s5 = ssub.s32 1, %s3
  %s6 = scalar_select 0, %s5, %s3
  $region1: #{tpu_custom_call.1} parent=0
    #allocation2 [shape = 'u8[8192]{0}', space=vmem, size = 0x2000, scoped, tag = 'input window, operand 0, single buffered']
    #allocation3 [shape = 's32[1]{0}', space=sflag, size = 0x4, scoped, tag = 'scoped memory for tpu_custom_call.1']
    #allocation4 [shape = 's32[1]{0}', space=sflag, size = 0x4, scoped, tag = 'scoped memory for tpu_custom_call.1']
    #allocation5 [shape = 'u8[8192]{0}', space=vmem, size = 0x2000, scoped, tag = 'input window, operand 1, single buffered']
    #allocation6 [shape = 's32[1]{0}', space=sflag, size = 0x4, scoped, tag = 'scoped memory for tpu_custom_call.1']
    #allocation7 [shape = 'u8[4096]{0}', space=vmem, size = 0x1000, scoped, tag = 'output window, operand 0, single buffered']
    %7 = vsyncpa [#allocation3], 0
    %8 = vsyncpa [#allocation6], 0
    %9 = vsyncpa [#allocation4], 0
    // Predicated region
    $region2: #{tpu_custom_call.1} parent=1 // pred_check
      _
    $region3: #{tpu_custom_call.1} parent=1 // pred_check_branch
      %11 = sbr.rel (0) target = $region5
    $region4: #{tpu_custom_call.1} parent=1 // pred_region
      %s13 = ssub.s32 256, 256
      %14 = vsyncadd [#allocation3], %s13
      %s15 = sshll.u32 [#allocation2], 4
      %s16 = int_to_ptr.vmem [resolvable:$true] %s15
      %21 = dma.hbm_to_vmem [thread:$0]  %s0, 256, %s16, [#allocation3], 128, 128, 8
    $region5: #{tpu_custom_call.1} parent=1 // pred_fallthru
      _
    // Predicated region
    $region6: #{tpu_custom_call.1} parent=1 // pred_check
      _
    $region7: #{tpu_custom_call.1} parent=1 // pred_check_branch
      %23 = sbr.rel (0) target = $region9
    $region8: #{tpu_custom_call.1} parent=1 // pred_region
      %s25 = ssub.s32 256, 256
      %26 = vsyncadd [#allocation6], %s25
      %s27 = sshll.u32 [#allocation5], 4
      %s28 = int_to_ptr.vmem [resolvable:$true] %s27
      %33 = dma.hbm_to_vmem [thread:$0]  %s1, 256, %s28, [#allocation6], 128, 128, 8
    $region9: #{tpu_custom_call.1} parent=1 // pred_fallthru
      _
    // Predicated region
    $region10: #{tpu_custom_call.1} parent=1 // pred_check
      _
    $region11: #{tpu_custom_call.1} parent=1 // pred_check_branch
      %35 = sbr.rel (0) target = $region13
    $region12: #{tpu_custom_call.1} parent=1 // pred_region
      %36 = dma.done [#allocation3], 256
    $region13: #{tpu_custom_call.1} parent=1 // pred_fallthru
      _
    // Predicated region
    $region14: #{tpu_custom_call.1} parent=1 // pred_check
      _
    $region15: #{tpu_custom_call.1} parent=1 // pred_check_branch
      %38 = sbr.rel (0) target = $region17
    $region16: #{tpu_custom_call.1} parent=1 // pred_region
      %39 = dma.done [#allocation6], 256
    $region17: #{tpu_custom_call.1} parent=1 // pred_fallthru
      _
    %v40 = vld [vmem:[#allocation2] sm:$0xff]
    %v41 = vld [vmem:[#allocation2 + $0x8] sm:$0xff]
    %v42 = vld [vmem:[#allocation5] sm:$0xff]
    %v43 = vld [vmem:[#allocation5 + $0x8] sm:$0xff]
    %v44 = vsub.f32 0.0, %v42
    %v45 = vsub.f32 0.0, %v43
    %v46 = vadd.f32 %v40, 1e-07
    %v47 = vadd.f32 %v41, 1e-07
    %v48 = vlog2.pop %v46
    %v49 = vmul.f32 %v48, 0.6931472
    %v50 = vlog2.pop %v47
    %v51 = vmul.f32 %v50, 0.6931472
    %v52 = vmul.f32 %v44, %v49
    %v53 = vmul.f32 %v45, %v51
    %v54 = vsub.f32 1.0, %v42
    %v55 = vsub.f32 1.0, %v43
    %v56 = vsub.f32 0.0, %v54
    %v57 = vsub.f32 0.0, %v55
    %v58 = vsub.f32 1.0, %v40
    %v59 = vsub.f32 1.0, %v41
    %v60 = vadd.f32 %v58, 1e-07
    %v61 = vadd.f32 %v59, 1e-07
    %v62 = vlog2.pop %v60
    %v63 = vmul.f32 %v62, 0.6931472
    %v64 = vlog2.pop %v61
    %v65 = vmul.f32 %v64, 0.6931472
    %v66 = vmul.f32 %v56, %v63
    %v67 = vmul.f32 %v57, %v65
    %v68 = vmul.f32 %v52, 2.0
    %v69 = vmul.f32 %v53, 2.0
    %v70 = vadd.f32 %v68, %v66
    %v71 = vadd.f32 %v69, %v67
    %v72 = vadd.f32 %v70, %v71
    %73 = vst [vmem:[#allocation7] sm:$0xff] %v72
    // Predicated region
    $region18: #{tpu_custom_call.1} parent=1 // pred_check
      _
    $region19: #{tpu_custom_call.1} parent=1 // pred_check_branch
      %75 = sbr.rel (0) target = $region21
    $region20: #{tpu_custom_call.1} parent=1 // pred_region
      %s77 = ssub.s32 128, 128
      %78 = vsyncadd [#allocation4], %s77
      %s80 = sshll.u32 [#allocation7], 4
      %s81 = int_to_ptr.vmem [resolvable:$true] %s80
      %83 = dma.vmem_to_hbm [thread:$0]  %s81, 128, %s2, [#allocation4]
    $region21: #{tpu_custom_call.1} parent=1 // pred_fallthru
      _
    // Predicated region
    $region22: #{tpu_custom_call.1} parent=1 // pred_check
      _
    $region23: #{tpu_custom_call.1} parent=1 // pred_check_branch
      %85 = sbr.rel (0) target = $region25
    $region24: #{tpu_custom_call.1} parent=1 // pred_region
      %86 = dma.done [#allocation4], 128
    $region25: #{tpu_custom_call.1} parent=1 // pred_fallthru
      _
    %87 = vsyncpa [#allocation3], 1
    %88 = vsyncpa [#allocation6], 1
    %89 = vsyncpa [#allocation4], 1

</llo_original>
